<compile_context>
chip_gen: v6e
topology: v6e:2x2x1
jax: 0.10.0
libtpu: 0.0.40
codegen_flags: <defaults>
</compile_context>

<pallas_src>
import functools

import jax
import jax.numpy as jnp
from jax.experimental import pallas as pl
from jax.experimental.pallas import tpu as pltpu

NUM_HIDDEN_LAYERS = 5      # num_layers in the PyTorch module
NEG_SLOPE = 0.5            # LeakyReLU negative slope


def _leaky_relu(h):
    return jnp.where(h >= 0, h, NEG_SLOPE * h)


def mlp_kernel(x_ref, w_in_ref, b_in_ref, w_hid_ref, b_hid_ref,
               w_out_ref, b_out_ref, o_ref):
    """Fused MLP forward for one batch tile, feature-major ([feat, B_tile])."""
    # input layer: [H, D] @ [D, Bt] -> [H, Bt]
    h = jnp.dot(w_in_ref[...], x_ref[...],
                preferred_element_type=jnp.float32) + b_in_ref[...]
    h = _leaky_relu(h)
    # hidden layers (static Python loop, L is a compile-time constant)
    for i in range(NUM_HIDDEN_LAYERS):
        h = jnp.dot(w_hid_ref[i], h,
                    preferred_element_type=jnp.float32) + b_hid_ref[i]
        h = _leaky_relu(h)
    # output layer: [D, H] @ [H, Bt] -> [D, Bt] (lane-dense store)
    o_ref[...] = (jnp.dot(w_out_ref[...], h,
                          preferred_element_type=jnp.float32)
                  + b_out_ref[...]).astype(o_ref.dtype)


@functools.partial(jax.jit, static_argnames=("batch_tile",))
def vector_field_mlp(x, params, *, batch_tile=512):
    """x: [B, D] -> [B, D]. batch_tile should be a multiple of 128."""
    B, D = x.shape
    H = params["w_in"].shape[0]
    L = params["w_hid"].shape[0]

    # Pad batch up to a multiple of batch_tile and go feature-major: [D, B_pad].
    B_pad = ((B + batch_tile - 1) // batch_tile) * batch_tile
    x_t = jnp.pad(x, ((0, B_pad - B), (0, 0))).T            # [D, B_pad]

    grid = (B_pad // batch_tile,)
    out_t = pl.pallas_call(
        mlp_kernel,
        out_shape=jax.ShapeDtypeStruct((D, B_pad), jnp.float32),
        grid=grid,
        in_specs=[
            pl.BlockSpec((D, batch_tile), lambda i: (0, i)),     # x tile [D, Bt]
            pl.BlockSpec((H, D), lambda i: (0, 0)),              # w_in   [H, D]
            pl.BlockSpec((H, 1), lambda i: (0, 0)),              # b_in   [H, 1]
            pl.BlockSpec((L, H, H), lambda i: (0, 0, 0)),        # w_hid  [L, H, H]
            pl.BlockSpec((L, H, 1), lambda i: (0, 0, 0)),        # b_hid  [L, H, 1]
            pl.BlockSpec((D, H), lambda i: (0, 0)),              # w_out  [D, H]
            pl.BlockSpec((D, 1), lambda i: (0, 0)),              # b_out  [D, 1]
        ],
        out_specs=pl.BlockSpec((D, batch_tile), lambda i: (0, i)),
        compiler_params=pltpu.CompilerParams(
            dimension_semantics=("parallel",)),
    )(x_t, params["w_in"], params["b_in"], params["w_hid"], params["b_hid"],
      params["w_out"], params["b_out"])

    return out_t[:, :B].T                                        # [B, D]


def init_params(key, input_dim, hidden_dim, num_layers=NUM_HIDDEN_LAYERS):
    """Deterministic PyTorch-style init: U(-1/sqrt(fan_in), 1/sqrt(fan_in)).
    Weights stored PyTorch-native as [out, in]; biases as [out, 1]."""
    def linear(k, fan_in, fan_out):
        kw, kb = jax.random.split(k)
        bound = 1.0 / jnp.sqrt(fan_in)
        w = jax.random.uniform(kw, (fan_out, fan_in), jnp.float32, -bound, bound)
        b = jax.random.uniform(kb, (fan_out, 1), jnp.float32, -bound, bound)
        return w, b

    keys = jax.random.split(key, num_layers + 2)
    w_in, b_in = linear(keys[0], input_dim, hidden_dim)
    w_hid, b_hid = [], []
    for i in range(num_layers):
        w, b = linear(keys[1 + i], hidden_dim, hidden_dim)
        w_hid.append(w)
        b_hid.append(b)
    w_out, b_out = linear(keys[-1], hidden_dim, input_dim)
    return {
        "w_in": w_in, "b_in": b_in,                        # [H, D], [H, 1]
        "w_hid": jnp.stack(w_hid, axis=0),                 # [L, H, H]
        "b_hid": jnp.stack(b_hid, axis=0),                 # [L, H, 1]
        "w_out": w_out, "b_out": b_out,                    # [D, H], [D, 1]
    }


def reference_mlp(x, params):
    """Pure-JAX reference mirroring the PyTorch forward (batch-major)."""
    hp = jax.lax.Precision.HIGHEST
    h = _leaky_relu(jnp.dot(x, params["w_in"].T, precision=hp)
                    + params["b_in"].T)
    for i in range(params["w_hid"].shape[0]):
        h = _leaky_relu(jnp.dot(h, params["w_hid"][i].T, precision=hp)
                        + params["b_hid"][i].T)
    return jnp.dot(h, params["w_out"].T, precision=hp) + params["b_out"].T


if __name__ == "__main__":
    INPUT_DIM = 4
    HIDDEN_DIM = 32
    BATCH = 256          # small, but enough for a 2-step grid at tile=128
    BATCH_TILE = 128     # multiple of 128 -> lane-dense; grid=(2,) for v7x TCs

    key = jax.random.PRNGKey(0)
    k_params, k_x = jax.random.split(key)
    params = init_params(k_params, INPUT_DIM, HIDDEN_DIM)
    x = jax.random.normal(k_x, (BATCH, INPUT_DIM), dtype=jnp.float32)

    out = vector_field_mlp(x, params, batch_tile=BATCH_TILE)
    out = jax.block_until_ready(out)

    ref = reference_mlp(x, params)
    assert out.shape == (BATCH, INPUT_DIM)
    assert jnp.allclose(out, ref, atol=1e-4, rtol=1e-4), "mismatch vs reference"

    print("KERNEL_OK")
</pallas_src>

<mosaic_0001>
module attributes {stable_mosaic.version = 11 : i64} {
  func.func @mlp_kernel(%arg0: i32, %arg1: memref<4x128xf32, #tpu.memory_space<vmem>>, %arg2: memref<32x4xf32, #tpu.memory_space<vmem>>, %arg3: memref<32x1xf32, #tpu.memory_space<vmem>>, %arg4: memref<5x32x32xf32, #tpu.memory_space<vmem>>, %arg5: memref<5x32x1xf32, #tpu.memory_space<vmem>>, %arg6: memref<4x32xf32, #tpu.memory_space<vmem>>, %arg7: memref<4x1xf32, #tpu.memory_space<vmem>>, %arg8: memref<4x128xf32, #tpu.memory_space<vmem>>) attributes {dimension_semantics = [#tpu.dimension_semantics<parallel>], iteration_bounds = array<i64: 2>, scalar_prefetch = 0 : i64, scratch_operands = 0 : i64, tpu.core_type = #tpu.core_type<tc>, window_params = [{transform_indices = @transform_0, window_bounds = array<i64: 4, 128>}, {pipeline_mode = #tpu.pipeline_mode<synchronous>, transform_indices = @transform_1, window_bounds = array<i64: 32, 4>}, {pipeline_mode = #tpu.pipeline_mode<synchronous>, transform_indices = @transform_2, window_bounds = array<i64: 32, 1>}, {pipeline_mode = #tpu.pipeline_mode<synchronous>, transform_indices = @transform_3, window_bounds = array<i64: 5, 32, 32>}, {pipeline_mode = #tpu.pipeline_mode<synchronous>, transform_indices = @transform_4, window_bounds = array<i64: 5, 32, 1>}, {pipeline_mode = #tpu.pipeline_mode<synchronous>, transform_indices = @transform_5, window_bounds = array<i64: 4, 32>}, {pipeline_mode = #tpu.pipeline_mode<synchronous>, transform_indices = @transform_6, window_bounds = array<i64: 4, 1>}, {transform_indices = @transform_7, window_bounds = array<i64: 4, 128>}]} {
    %c0 = arith.constant 0 : index
    %c0_0 = arith.constant 0 : index
    %0 = vector.load %arg2[%c0, %c0_0] : memref<32x4xf32, #tpu.memory_space<vmem>>, vector<32x4xf32>
    %c0_1 = arith.constant 0 : index
    %c0_2 = arith.constant 0 : index
    %1 = vector.load %arg1[%c0_1, %c0_2] : memref<4x128xf32, #tpu.memory_space<vmem>>, vector<4x128xf32>
    %cst = arith.constant dense<0.000000e+00> : vector<32x128xf32>
    %2 = tpu.matmul %0, %1, %cst {dimension_numbers = #tpu.dot_dimension_numbers<[1], [0], [0], [1], [0, 0, 1, 1], [], []>} : vector<32x4xf32>, vector<4x128xf32>, vector<32x128xf32> -> vector<32x128xf32>
    %c0_3 = arith.constant 0 : index
    %c0_4 = arith.constant 0 : index
    %3 = vector.load %arg3[%c0_3, %c0_4] : memref<32x1xf32, #tpu.memory_space<vmem>>, vector<32x1xf32>
    %4 = vector.broadcast %3 : vector<32x1xf32> to vector<32x128xf32>
    %5 = arith.addf %2, %4 : vector<32x128xf32>
    %cst_5 = arith.constant 0.000000e+00 : f32
    %6 = vector.broadcast %cst_5 : f32 to vector<32x128xf32>
    %7 = arith.cmpf oge, %5, %6 : vector<32x128xf32>
    %cst_6 = arith.constant 5.000000e-01 : f32
    %8 = vector.broadcast %cst_6 : f32 to vector<32x128xf32>
    %9 = arith.mulf %8, %5 : vector<32x128xf32>
    %10 = arith.select %7, %5, %9 : vector<32x128xi1>, vector<32x128xf32>
    %c0_7 = arith.constant 0 : index
    %c0_8 = arith.constant 0 : index
    %c0_9 = arith.constant 0 : index
    %11 = vector.load %arg4[%c0_7, %c0_8, %c0_9] : memref<5x32x32xf32, #tpu.memory_space<vmem>>, vector<1x32x32xf32>
    %12 = vector.shape_cast %11 : vector<1x32x32xf32> to vector<32x32xf32>
    %cst_10 = arith.constant dense<0.000000e+00> : vector<32x128xf32>
    %13 = tpu.matmul %12, %10, %cst_10 {dimension_numbers = #tpu.dot_dimension_numbers<[1], [0], [0], [1], [0, 0, 1, 1], [], []>} : vector<32x32xf32>, vector<32x128xf32>, vector<32x128xf32> -> vector<32x128xf32>
    %c0_11 = arith.constant 0 : index
    %c0_12 = arith.constant 0 : index
    %c0_13 = arith.constant 0 : index
    %14 = vector.load %arg5[%c0_11, %c0_12, %c0_13] : memref<5x32x1xf32, #tpu.memory_space<vmem>>, vector<1x32x1xf32>
    %15 = vector.shape_cast %14 : vector<1x32x1xf32> to vector<32x1xf32>
    %16 = vector.broadcast %15 : vector<32x1xf32> to vector<32x128xf32>
    %17 = arith.addf %13, %16 : vector<32x128xf32>
    %cst_14 = arith.constant 0.000000e+00 : f32
    %18 = vector.broadcast %cst_14 : f32 to vector<32x128xf32>
    %19 = arith.cmpf oge, %17, %18 : vector<32x128xf32>
    %cst_15 = arith.constant 5.000000e-01 : f32
    %20 = vector.broadcast %cst_15 : f32 to vector<32x128xf32>
    %21 = arith.mulf %20, %17 : vector<32x128xf32>
    %22 = arith.select %19, %17, %21 : vector<32x128xi1>, vector<32x128xf32>
    %c1 = arith.constant 1 : index
    %c0_16 = arith.constant 0 : index
    %c0_17 = arith.constant 0 : index
    %23 = vector.load %arg4[%c1, %c0_16, %c0_17] : memref<5x32x32xf32, #tpu.memory_space<vmem>>, vector<1x32x32xf32>
    %24 = vector.shape_cast %23 : vector<1x32x32xf32> to vector<32x32xf32>
    %cst_18 = arith.constant dense<0.000000e+00> : vector<32x128xf32>
    %25 = tpu.matmul %24, %22, %cst_18 {dimension_numbers = #tpu.dot_dimension_numbers<[1], [0], [0], [1], [0, 0, 1, 1], [], []>} : vector<32x32xf32>, vector<32x128xf32>, vector<32x128xf32> -> vector<32x128xf32>
    %c1_19 = arith.constant 1 : index
    %c0_20 = arith.constant 0 : index
    %c0_21 = arith.constant 0 : index
    %26 = vector.load %arg5[%c1_19, %c0_20, %c0_21] : memref<5x32x1xf32, #tpu.memory_space<vmem>>, vector<1x32x1xf32>
    %27 = vector.shape_cast %26 : vector<1x32x1xf32> to vector<32x1xf32>
    %28 = vector.broadcast %27 : vector<32x1xf32> to vector<32x128xf32>
    %29 = arith.addf %25, %28 : vector<32x128xf32>
    %cst_22 = arith.constant 0.000000e+00 : f32
    %30 = vector.broadcast %cst_22 : f32 to vector<32x128xf32>
    %31 = arith.cmpf oge, %29, %30 : vector<32x128xf32>
    %cst_23 = arith.constant 5.000000e-01 : f32
    %32 = vector.broadcast %cst_23 : f32 to vector<32x128xf32>
    %33 = arith.mulf %32, %29 : vector<32x128xf32>
    %34 = arith.select %31, %29, %33 : vector<32x128xi1>, vector<32x128xf32>
    %c2 = arith.constant 2 : index
    %c0_24 = arith.constant 0 : index
    %c0_25 = arith.constant 0 : index
    %35 = vector.load %arg4[%c2, %c0_24, %c0_25] : memref<5x32x32xf32, #tpu.memory_space<vmem>>, vector<1x32x32xf32>
    %36 = vector.shape_cast %35 : vector<1x32x32xf32> to vector<32x32xf32>
    %cst_26 = arith.constant dense<0.000000e+00> : vector<32x128xf32>
    %37 = tpu.matmul %36, %34, %cst_26 {dimension_numbers = #tpu.dot_dimension_numbers<[1], [0], [0], [1], [0, 0, 1, 1], [], []>} : vector<32x32xf32>, vector<32x128xf32>, vector<32x128xf32> -> vector<32x128xf32>
    %c2_27 = arith.constant 2 : index
    %c0_28 = arith.constant 0 : index
    %c0_29 = arith.constant 0 : index
    %38 = vector.load %arg5[%c2_27, %c0_28, %c0_29] : memref<5x32x1xf32, #tpu.memory_space<vmem>>, vector<1x32x1xf32>
    %39 = vector.shape_cast %38 : vector<1x32x1xf32> to vector<32x1xf32>
    %40 = vector.broadcast %39 : vector<32x1xf32> to vector<32x128xf32>
    %41 = arith.addf %37, %40 : vector<32x128xf32>
    %cst_30 = arith.constant 0.000000e+00 : f32
    %42 = vector.broadcast %cst_30 : f32 to vector<32x128xf32>
    %43 = arith.cmpf oge, %41, %42 : vector<32x128xf32>
    %cst_31 = arith.constant 5.000000e-01 : f32
    %44 = vector.broadcast %cst_31 : f32 to vector<32x128xf32>
    %45 = arith.mulf %44, %41 : vector<32x128xf32>
    %46 = arith.select %43, %41, %45 : vector<32x128xi1>, vector<32x128xf32>
    %c3 = arith.constant 3 : index
    %c0_32 = arith.constant 0 : index
    %c0_33 = arith.constant 0 : index
    %47 = vector.load %arg4[%c3, %c0_32, %c0_33] : memref<5x32x32xf32, #tpu.memory_space<vmem>>, vector<1x32x32xf32>
    %48 = vector.shape_cast %47 : vector<1x32x32xf32> to vector<32x32xf32>
    %cst_34 = arith.constant dense<0.000000e+00> : vector<32x128xf32>
    %49 = tpu.matmul %48, %46, %cst_34 {dimension_numbers = #tpu.dot_dimension_numbers<[1], [0], [0], [1], [0, 0, 1, 1], [], []>} : vector<32x32xf32>, vector<32x128xf32>, vector<32x128xf32> -> vector<32x128xf32>
    %c3_35 = arith.constant 3 : index
    %c0_36 = arith.constant 0 : index
    %c0_37 = arith.constant 0 : index
    %50 = vector.load %arg5[%c3_35, %c0_36, %c0_37] : memref<5x32x1xf32, #tpu.memory_space<vmem>>, vector<1x32x1xf32>
    %51 = vector.shape_cast %50 : vector<1x32x1xf32> to vector<32x1xf32>
    %52 = vector.broadcast %51 : vector<32x1xf32> to vector<32x128xf32>
    %53 = arith.addf %49, %52 : vector<32x128xf32>
    %cst_38 = arith.constant 0.000000e+00 : f32
    %54 = vector.broadcast %cst_38 : f32 to vector<32x128xf32>
    %55 = arith.cmpf oge, %53, %54 : vector<32x128xf32>
    %cst_39 = arith.constant 5.000000e-01 : f32
    %56 = vector.broadcast %cst_39 : f32 to vector<32x128xf32>
    %57 = arith.mulf %56, %53 : vector<32x128xf32>
    %58 = arith.select %55, %53, %57 : vector<32x128xi1>, vector<32x128xf32>
    %c4 = arith.constant 4 : index
    %c0_40 = arith.constant 0 : index
    %c0_41 = arith.constant 0 : index
    %59 = vector.load %arg4[%c4, %c0_40, %c0_41] : memref<5x32x32xf32, #tpu.memory_space<vmem>>, vector<1x32x32xf32>
    %60 = vector.shape_cast %59 : vector<1x32x32xf32> to vector<32x32xf32>
    %cst_42 = arith.constant dense<0.000000e+00> : vector<32x128xf32>
    %61 = tpu.matmul %60, %58, %cst_42 {dimension_numbers = #tpu.dot_dimension_numbers<[1], [0], [0], [1], [0, 0, 1, 1], [], []>} : vector<32x32xf32>, vector<32x128xf32>, vector<32x128xf32> -> vector<32x128xf32>
    %c4_43 = arith.constant 4 : index
    %c0_44 = arith.constant 0 : index
    %c0_45 = arith.constant 0 : index
    %62 = vector.load %arg5[%c4_43, %c0_44, %c0_45] : memref<5x32x1xf32, #tpu.memory_space<vmem>>, vector<1x32x1xf32>
    %63 = vector.shape_cast %62 : vector<1x32x1xf32> to vector<32x1xf32>
    %64 = vector.broadcast %63 : vector<32x1xf32> to vector<32x128xf32>
    %65 = arith.addf %61, %64 : vector<32x128xf32>
    %cst_46 = arith.constant 0.000000e+00 : f32
    %66 = vector.broadcast %cst_46 : f32 to vector<32x128xf32>
    %67 = arith.cmpf oge, %65, %66 : vector<32x128xf32>
    %cst_47 = arith.constant 5.000000e-01 : f32
    %68 = vector.broadcast %cst_47 : f32 to vector<32x128xf32>
    %69 = arith.mulf %68, %65 : vector<32x128xf32>
    %70 = arith.select %67, %65, %69 : vector<32x128xi1>, vector<32x128xf32>
    %c0_48 = arith.constant 0 : index
    %c0_49 = arith.constant 0 : index
    %71 = vector.load %arg6[%c0_48, %c0_49] : memref<4x32xf32, #tpu.memory_space<vmem>>, vector<4x32xf32>
    %cst_50 = arith.constant dense<0.000000e+00> : vector<4x128xf32>
    %72 = tpu.matmul %71, %70, %cst_50 {dimension_numbers = #tpu.dot_dimension_numbers<[1], [0], [0], [1], [0, 0, 1, 1], [], []>} : vector<4x32xf32>, vector<32x128xf32>, vector<4x128xf32> -> vector<4x128xf32>
    %c0_51 = arith.constant 0 : index
    %c0_52 = arith.constant 0 : index
    %73 = vector.load %arg7[%c0_51, %c0_52] : memref<4x1xf32, #tpu.memory_space<vmem>>, vector<4x1xf32>
    %74 = vector.broadcast %73 : vector<4x1xf32> to vector<4x128xf32>
    %75 = arith.addf %72, %74 : vector<4x128xf32>
    %c0_53 = arith.constant 0 : index
    %c0_54 = arith.constant 0 : index
    %76 = vector.load %arg8[%c0_53, %c0_54] : memref<4x128xf32, #tpu.memory_space<vmem>>, vector<4x128xf32>
    tpu.vector_store %arg8[%c0_53, %c0_54], %75 {strides = array<i32>} : memref<4x128xf32, #tpu.memory_space<vmem>>, vector<4x128xf32>,
    return
  }
  func.func @transform_0(%arg0: i32) -> (i32, i32) {
    %c0_i32 = arith.constant 0 : i32
    %c0_i32_0 = arith.constant 0 : i32
    return %c0_i32, %arg0 : i32, i32
  }
  func.func @transform_1(%arg0: i32) -> (i32, i32) {
    %c0_i32 = arith.constant 0 : i32
    %c0_i32_0 = arith.constant 0 : i32
    %c0_i32_1 = arith.constant 0 : i32
    return %c0_i32, %c0_i32_0 : i32, i32
  }
  func.func @transform_2(%arg0: i32) -> (i32, i32) {
    %c0_i32 = arith.constant 0 : i32
    %c0_i32_0 = arith.constant 0 : i32
    %c0_i32_1 = arith.constant 0 : i32
    return %c0_i32, %c0_i32_0 : i32, i32
  }
  func.func @transform_3(%arg0: i32) -> (i32, i32, i32) {
    %c0_i32 = arith.constant 0 : i32
    %c0_i32_0 = arith.constant 0 : i32
    %c0_i32_1 = arith.constant 0 : i32
    %c0_i32_2 = arith.constant 0 : i32
    return %c0_i32, %c0_i32_0, %c0_i32_1 : i32, i32, i32
  }
  func.func @transform_4(%arg0: i32) -> (i32, i32, i32) {
    %c0_i32 = arith.constant 0 : i32
    %c0_i32_0 = arith.constant 0 : i32
    %c0_i32_1 = arith.constant 0 : i32
    %c0_i32_2 = arith.constant 0 : i32
    return %c0_i32, %c0_i32_0, %c0_i32_1 : i32, i32, i32
  }
  func.func @transform_5(%arg0: i32) -> (i32, i32) {
    %c0_i32 = arith.constant 0 : i32
    %c0_i32_0 = arith.constant 0 : i32
    %c0_i32_1 = arith.constant 0 : i32
    return %c0_i32, %c0_i32_0 : i32, i32
  }
  func.func @transform_6(%arg0: i32) -> (i32, i32) {
    %c0_i32 = arith.constant 0 : i32
    %c0_i32_0 = arith.constant 0 : i32
    %c0_i32_1 = arith.constant 0 : i32
    return %c0_i32, %c0_i32_0 : i32, i32
  }
  func.func @transform_7(%arg0: i32) -> (i32, i32) {
    %c0_i32 = arith.constant 0 : i32
    %c0_i32_0 = arith.constant 0 : i32
    return %c0_i32, %arg0 : i32, i32
  }
}

</mosaic_0001>

<llo_original>
// kernel: vector_field_mlp.1
$region0: #{vector_field_mlp.1}
  #allocation0 [shape = 'u32[]', space=smem, size = 0x4, offset = 0x4, fixed_abs, tag = 'smem constant byte address 0x4 - core index']
  #allocation1 [shape = 'u32[144,128]{1,0:T(1,128)}', space=vmem, size = 0x12000, scoped, tag = 'internal scratch']
  %s0 = inlined_call_operand.vmem [shape: f32[4,256], index: 0, kind: input, shape index: {}]
  %s1 = inlined_call_operand.vmem [shape: f32[32,4], index: 1, kind: input, shape index: {}]
  %s2 = inlined_call_operand.vmem [shape: f32[32,1], index: 2, kind: input, shape index: {}]
  %s3 = inlined_call_operand.vmem [shape: f32[5,32,32], index: 3, kind: input, shape index: {}]
  %s4 = inlined_call_operand.vmem [shape: f32[5,32,1], index: 4, kind: input, shape index: {}]
  %s5 = inlined_call_operand.vmem [shape: f32[4,32], index: 5, kind: input, shape index: {}]
  %s6 = inlined_call_operand.vmem [shape: f32[4,1], index: 6, kind: input, shape index: {}]
  %s7 = inlined_call_operand.hbm [shape: f32[4,256], index: 7, kind: output, shape index: {}]
  %s8 = sld [smem:[#allocation0]]
  $region61: #{vector_field_mlp.1} parent=0
    _
  %s10 = ssub.s32 1, %s8
  %s11 = scalar_select 0, %s10, %s8
  $region1: #{vector_field_mlp.1} parent=0
    #allocation2 [shape = 'u8[4096]{0}', space=vmem, size = 0x1000, scoped, tag = 'output window, operand 0']
    #allocation3 [shape = 's32[2]{0}', space=sflag, size = 0x8, scoped, tag = 'scoped memory for vector_field_mlp.1']
    %12 = vsyncpa [#allocation3], 0
    %s13 = scalar_lea.sflag [#allocation3], 1
    %14 = vsyncpa %s13, 0
    loop: start=0, step=1, limit=4
    $region2: #{vector_field_mlp.1} parent=1 // loop_pre_header
      _
    $region3: #{vector_field_mlp.1} parent=1 // loop_header
      %s16 = sphi 0, %s20
      %p17 = scmp.ge.s32.totalorder %s16, 4
      %s26 = sphi 0, %s28
      %s29 = sphi 0, %s26
      %s30 = sphi 0, %s29
      %s46 = sphi 0, %s30
      %s50 = sphi 0, %s50
      %s52 = sphi 0, %s50
      %s53 = sphi 0, %s52
      %s67 = sphi 0, %s53
      %s71 = sphi 0, %s71
      %s73 = sphi 0, %s71
      %s74 = sphi 0, %s73
      %s88 = sphi 0, %s74
      %s92 = sphi 0, %s92
      %s94 = sphi 0, %s92
      %s95 = sphi 0, %s94
      %s109 = sphi 0, %s95
      %s113 = sphi 0, %s113
      %s115 = sphi 0, %s113
      %s116 = sphi 0, %s115
      %s130 = sphi 0, %s116
      %s134 = sphi 0, %s134
      %s136 = sphi 0, %s134
      %s137 = sphi 0, %s136
      %s151 = sphi 0, %s137
      %s155 = sphi 0, %s155
      %s157 = sphi 0, %s155
      %s158 = sphi 0, %s157
      %s172 = sphi 0, %s158
      %s178 = sphi 0, %s180
      %s181 = sphi 0, %s178
      %s182 = sphi 0, %s181
      %s198 = sphi 0, %s182
    $region4: #{vector_field_mlp.1} parent=1 // loop_header_branch
      %19 = sbr.rel (%p17) target = $region8
    $region5: #{vector_field_mlp.1} parent=1 // loop_body
      %s21 = ssub.s32 %s16, 1
      %s22 = ssub.s32 %s16, 2
      %s23 = sadd.s32 %s16, 1
      %s24 = ssub.s32 %s16, %s23
      %p25 = scmp.eq.s32.totalorder %s24, 0
      %s27 = sadd.s32 %s26, 1
      %s28 = scalar_select %p25, %s26, %s27
      %p31 = pneg %p25
      %p32 = scmp.eq.s32.totalorder %s16, 1
      %p33 = por %p31, %p32
      %p34 = scmp.ne.s32.totalorder %s26, %s29
      %p35 = scmp.eq.s32.totalorder %s16, 0
      %p36 = por %p34, %p35
      %p37 = scmp.ne.s32.totalorder %s26, %s29
      %p38 = scmp.eq.s32.totalorder %s21, 1
      %p39 = por %p37, %p38
      %p40 = scmp.ne.s32.totalorder %s29, %s30
      %p41 = scmp.eq.s32.totalorder %s21, 0
      %p42 = por %p40, %p41
      %p43 = scmp.ne.s32.totalorder %s29, %s30
      %p44 = scmp.eq.s32.totalorder %s22, 1
      %p45 = por %p43, %p44
      %p47 = scmp.ne.s32.totalorder %s30, %s46
      %p48 = scmp.eq.s32.totalorder %s22, 0
      %p49 = por %p47, %p48
      %s51 = sadd.s32 %s50, 1
      %p54 = scmp.eq.s32.totalorder %s16, 1
      %p55 = scmp.ne.s32.totalorder %s50, %s52
      %p56 = scmp.eq.s32.totalorder %s16, 0
      %p57 = por %p55, %p56
      %p58 = scmp.ne.s32.totalorder %s50, %s52
      %p59 = scmp.eq.s32.totalorder %s21, 1
      %p60 = por %p58, %p59
      %p61 = scmp.ne.s32.totalorder %s52, %s53
      %p62 = scmp.eq.s32.totalorder %s21, 0
      %p63 = por %p61, %p62
      %p64 = scmp.ne.s32.totalorder %s52, %s53
      %p65 = scmp.eq.s32.totalorder %s22, 1
      %p66 = por %p64, %p65
      %p68 = scmp.ne.s32.totalorder %s53, %s67
      %p69 = scmp.eq.s32.totalorder %s22, 0
      %p70 = por %p68, %p69
      %s72 = sadd.s32 %s71, 1
      %p75 = scmp.eq.s32.totalorder %s16, 1
      %p76 = scmp.ne.s32.totalorder %s71, %s73
      %p77 = scmp.eq.s32.totalorder %s16, 0
      %p78 = por %p76, %p77
      %p79 = scmp.ne.s32.totalorder %s71, %s73
      %p80 = scmp.eq.s32.totalorder %s21, 1
      %p81 = por %p79, %p80
      %p82 = scmp.ne.s32.totalorder %s73, %s74
      %p83 = scmp.eq.s32.totalorder %s21, 0
      %p84 = por %p82, %p83
      %p85 = scmp.ne.s32.totalorder %s73, %s74
      %p86 = scmp.eq.s32.totalorder %s22, 1
      %p87 = por %p85, %p86
      %p89 = scmp.ne.s32.totalorder %s74, %s88
      %p90 = scmp.eq.s32.totalorder %s22, 0
      %p91 = por %p89, %p90
      %s93 = sadd.s32 %s92, 1
      %p96 = scmp.eq.s32.totalorder %s16, 1
      %p97 = scmp.ne.s32.totalorder %s92, %s94
      %p98 = scmp.eq.s32.totalorder %s16, 0
      %p99 = por %p97, %p98
      %p100 = scmp.ne.s32.totalorder %s92, %s94
      %p101 = scmp.eq.s32.totalorder %s21, 1
      %p102 = por %p100, %p101
      %p103 = scmp.ne.s32.totalorder %s94, %s95
      %p104 = scmp.eq.s32.totalorder %s21, 0
      %p105 = por %p103, %p104
      %p106 = scmp.ne.s32.totalorder %s94, %s95
      %p107 = scmp.eq.s32.totalorder %s22, 1
      %p108 = por %p106, %p107
      %p110 = scmp.ne.s32.totalorder %s95, %s109
      %p111 = scmp.eq.s32.totalorder %s22, 0
      %p112 = por %p110, %p111
      %s114 = sadd.s32 %s113, 1
      %p117 = scmp.eq.s32.totalorder %s16, 1
      %p118 = scmp.ne.s32.totalorder %s113, %s115
      %p119 = scmp.eq.s32.totalorder %s16, 0
      %p120 = por %p118, %p119
      %p121 = scmp.ne.s32.totalorder %s113, %s115
      %p122 = scmp.eq.s32.totalorder %s21, 1
      %p123 = por %p121, %p122
      %p124 = scmp.ne.s32.totalorder %s115, %s116
      %p125 = scmp.eq.s32.totalorder %s21, 0
      %p126 = por %p124, %p125
      %p127 = scmp.ne.s32.totalorder %s115, %s116
      %p128 = scmp.eq.s32.totalorder %s22, 1
      %p129 = por %p127, %p128
      %p131 = scmp.ne.s32.totalorder %s116, %s130
      %p132 = scmp.eq.s32.totalorder %s22, 0
      %p133 = por %p131, %p132
      %s135 = sadd.s32 %s134, 1
      %p138 = scmp.eq.s32.totalorder %s16, 1
      %p139 = scmp.ne.s32.totalorder %s134, %s136
      %p140 = scmp.eq.s32.totalorder %s16, 0
      %p141 = por %p139, %p140
      %p142 = scmp.ne.s32.totalorder %s134, %s136
      %p143 = scmp.eq.s32.totalorder %s21, 1
      %p144 = por %p142, %p143
      %p145 = scmp.ne.s32.totalorder %s136, %s137
      %p146 = scmp.eq.s32.totalorder %s21, 0
      %p147 = por %p145, %p146
      %p148 = scmp.ne.s32.totalorder %s136, %s137
      %p149 = scmp.eq.s32.totalorder %s22, 1
      %p150 = por %p148, %p149
      %p152 = scmp.ne.s32.totalorder %s137, %s151
      %p153 = scmp.eq.s32.totalorder %s22, 0
      %p154 = por %p152, %p153
      %s156 = sadd.s32 %s155, 1
      %p159 = scmp.eq.s32.totalorder %s16, 1
      %p160 = scmp.ne.s32.totalorder %s155, %s157
      %p161 = scmp.eq.s32.totalorder %s16, 0
      %p162 = por %p160, %p161
      %p163 = scmp.ne.s32.totalorder %s155, %s157
      %p164 = scmp.eq.s32.totalorder %s21, 1
      %p165 = por %p163, %p164
      %p166 = scmp.ne.s32.totalorder %s157, %s158
      %p167 = scmp.eq.s32.totalorder %s21, 0
      %p168 = por %p166, %p167
      %p169 = scmp.ne.s32.totalorder %s157, %s158
      %p170 = scmp.eq.s32.totalorder %s22, 1
      %p171 = por %p169, %p170
      %p173 = scmp.ne.s32.totalorder %s158, %s172
      %p174 = scmp.eq.s32.totalorder %s22, 0
      %p175 = por %p173, %p174
      %s176 = ssub.s32 %s16, %s23
      %p177 = scmp.eq.s32.totalorder %s176, 0
      %s179 = sadd.s32 %s178, 1
      %s180 = scalar_select %p177, %s178, %s179
      %p183 = pneg %p177
      %p184 = scmp.eq.s32.totalorder %s16, 1
      %p185 = por %p183, %p184
      %p186 = scmp.ne.s32.totalorder %s178, %s181
      %p187 = scmp.eq.s32.totalorder %s16, 0
      %p188 = por %p186, %p187
      %p189 = scmp.ne.s32.totalorder %s178, %s181
      %p190 = scmp.eq.s32.totalorder %s21, 1
      %p191 = por %p189, %p190
      %p192 = scmp.ne.s32.totalorder %s181, %s182
      %p193 = scmp.eq.s32.totalorder %s21, 0
      %p194 = por %p192, %p193
      %p195 = scmp.ne.s32.totalorder %s181, %s182
      %p196 = scmp.eq.s32.totalorder %s22, 1
      %p197 = por %p195, %p196
      %p199 = scmp.ne.s32.totalorder %s182, %s198
      %p200 = scmp.eq.s32.totalorder %s22, 0
      %p201 = por %p199, %p200
      %p202 = scmp.le.s32.totalorder 1, %s16
      %p203 = scmp.lt.s32.totalorder %s16, 3
      %p204 = pnand %p202, %p203
      %p205 = pneg %p204
      // Predicated region
      $region9: #{vector_field_mlp.1} parent=5 // pred_check
        _
      $region10: #{vector_field_mlp.1} parent=5 // pred_check_branch
        %207 = sbr.rel (%p204) target = $region12
      $region11: #{vector_field_mlp.1} parent=5 // pred_region
        %s208 = ssub.s32 %s16, 1
        // Predicated region
        $region13: #{vector_field_mlp.1} parent=11 // pred_check
          %p209 = pneg %p63
        $region14: #{vector_field_mlp.1} parent=11 // pred_check_branch
          %211 = sbr.rel (%p209) target = $region16
        $region15: #{vector_field_mlp.1} parent=11 // pred_region
          _
        $region16: #{vector_field_mlp.1} parent=11 // pred_fallthru
          _
        // Predicated region
        $region17: #{vector_field_mlp.1} parent=11 // pred_check
          %p212 = pneg %p84
        $region18: #{vector_field_mlp.1} parent=11 // pred_check_branch
          %214 = sbr.rel (%p212) target = $region20
        $region19: #{vector_field_mlp.1} parent=11 // pred_region
          _
        $region20: #{vector_field_mlp.1} parent=11 // pred_fallthru
          _
        // Predicated region
        $region21: #{vector_field_mlp.1} parent=11 // pred_check
          %p215 = pneg %p105
        $region22: #{vector_field_mlp.1} parent=11 // pred_check_branch
          %217 = sbr.rel (%p215) target = $region24
        $region23: #{vector_field_mlp.1} parent=11 // pred_region
          _
        $region24: #{vector_field_mlp.1} parent=11 // pred_fallthru
          _
        // Predicated region
        $region25: #{vector_field_mlp.1} parent=11 // pred_check
          %p218 = pneg %p126
        $region26: #{vector_field_mlp.1} parent=11 // pred_check_branch
          %220 = sbr.rel (%p218) target = $region28
        $region27: #{vector_field_mlp.1} parent=11 // pred_region
          _
        $region28: #{vector_field_mlp.1} parent=11 // pred_fallthru
          _
        // Predicated region
        $region29: #{vector_field_mlp.1} parent=11 // pred_check
          %p221 = pneg %p147
        $region30: #{vector_field_mlp.1} parent=11 // pred_check_branch
          %223 = sbr.rel (%p221) target = $region32
        $region31: #{vector_field_mlp.1} parent=11 // pred_region
          _
        $region32: #{vector_field_mlp.1} parent=11 // pred_fallthru
          _
        // Predicated region
        $region33: #{vector_field_mlp.1} parent=11 // pred_check
          %p224 = pneg %p168
        $region34: #{vector_field_mlp.1} parent=11 // pred_check_branch
          %226 = sbr.rel (%p224) target = $region36
        $region35: #{vector_field_mlp.1} parent=11 // pred_region
          _
        $region36: #{vector_field_mlp.1} parent=11 // pred_fallthru
          _
      $region12: #{vector_field_mlp.1} parent=5 // pred_fallthru
        _
      %p227 = scmp.lt.s32.totalorder %s16, 2
      // Predicated region
      $region37: #{vector_field_mlp.1} parent=5 // pred_check
        %p228 = pneg %p227
      $region38: #{vector_field_mlp.1} parent=5 // pred_check_branch
        %230 = sbr.rel (%p228) target = $region40
      $region39: #{vector_field_mlp.1} parent=5 // pred_region
        // Predicated region
        $region41: #{vector_field_mlp.1} parent=39 // pred_check
          %p231 = pneg %p36
        $region42: #{vector_field_mlp.1} parent=39 // pred_check_branch
          %233 = sbr.rel (%p231) target = $region44
        $region43: #{vector_field_mlp.1} parent=39 // pred_region
          %p234 = scmp.lt.s32.totalorder %s16, 1
          %s235 = scalar_select %p234, %s16, 1
          %s236 = smul.addr %s235, 4
          %s237 = scalar_lea.vmem %s0, %s236
        $region44: #{vector_field_mlp.1} parent=39 // pred_fallthru
          _
      $region40: #{vector_field_mlp.1} parent=5 // pred_fallthru
        _
      %p238 = scmp.le.s32.totalorder 1, %s16
      %p239 = scmp.lt.s32.totalorder %s16, 3
      %p240 = pnand %p238, %p239
      %p241 = pneg %p240
      // Predicated region
      $region45: #{vector_field_mlp.1} parent=5 // pred_check
        _
      $region46: #{vector_field_mlp.1} parent=5 // pred_check_branch
        %243 = sbr.rel (%p240) target = $region48
      $region47: #{vector_field_mlp.1} parent=5 // pred_region
        %s244 = ssub.s32 %s16, 1
        %p245 = scmp.lt.s32.totalorder %s21, 1
        %s246 = scalar_select %p245, %s21, 1
        %s247 = smul.addr %s246, 4
        %s248 = scalar_lea.vmem %s0, %s247
        %p249 = pneg %p42
        %p250 = pneg %p39
        %p251 = pneg %p63
        %p252 = pneg %p60
        %p253 = pneg %p84
        %p254 = pneg %p81
        %p255 = pneg %p105
        %p256 = pneg %p102
        %p257 = pneg %p126
        %p258 = pneg %p123
        %p259 = pneg %p147
        %p260 = pneg %p144
        %p261 = pneg %p168
        %p262 = pneg %p165
        %p263 = pneg %p194
        %p264 = pneg %p191
        %s265 = sand.u32 %s181, 1
        %s266 = scalar_lea.sflag [#allocation3], %s265
        %s267 = sand.u32 %s181, 1
        %s268 = smul.addr %s267, 4
        %s269 = scalar_lea.vmem [#allocation2], %s268
        %p270 = scmp.lt.s32.totalorder %s21, 1
        %s271 = scalar_select %p270, %s21, 1
        %s272 = smul.addr %s271, 4
        %s273 = scalar_lea.vmem %s0, %s272
        %v274 = vld [vmem:[%s1] sm:$0xff]
        %v275 = vld [vmem:[%s1 + $0x8] sm:$0xff]
        %v276 = vld [vmem:[%s1 + $0x10] sm:$0xff]
        %v277 = vld [vmem:[%s1 + $0x18] sm:$0xff]
        %v278 = vld [vmem:[%s273] sm:$0xf]
        %v279 = vld [vmem:[%s2] sm:$0xff]
        %v280 = vld [vmem:[%s2 + $0x8] sm:$0xff]
        %v281 = vld [vmem:[%s2 + $0x10] sm:$0xff]
        %v282 = vld [vmem:[%s2 + $0x18] sm:$0xff]
        %284 = vset.pattern.permute.xlu0 0
        %285 = vperm.xlu0 %284, %v279
        %v286 = vpop.permute.xlu0 %285
        %289 = vset.pattern.permute.xlu0 0
        %290 = vperm.xlu0 %289, %v280
        %v291 = vpop.permute.xlu0 %290
        %294 = vset.pattern.permute.xlu0 0
        %295 = vperm.xlu0 %294, %v281
        %v296 = vpop.permute.xlu0 %295
        %299 = vset.pattern.permute.xlu0 0
        %300 = vperm.xlu0 %299, %v282
        %v301 = vpop.permute.xlu0 %300
        %vm303 = vcmask 31744
        %v305 = vsel %vm303, %v274, 0
        %v308 = vsel %vm303, %v275, 0
        %v311 = vsel %vm303, %v276, 0
        %v314 = vsel %vm303, %v277, 0
        %vm316 = vcmask 1043456
        %v318 = vsel %vm316, %v278, 0
        %320 = vmatprep.subr.mxu0 0.0
        %321 = vmatpush1.msra.mxu0 0.0
        %322 = vmatprep.subr.mxu0 0.0
        %323 = vmatpush1.msra.mxu0 0.0
        %324 = vmatprep.subr.mxu0 0.0
        %325 = vmatpush1.msra.mxu0 0.0
        %326 = vmatprep.subr.mxu0 0.0
        %327 = vmatpush1.msra.mxu0 0.0
        %328 = vmatprep.subr.mxu0 0.0
        %329 = vmatpush1.msra.mxu0 0.0
        %330 = vmatprep.subr.mxu0 0.0
        %331 = vmatpush1.msra.mxu0 0.0
        %332 = vmatprep.subr.mxu0 0.0
        %333 = vmatpush1.msra.mxu0 0.0
        %334 = vmatprep.subr.mxu0 0.0
        %335 = vmatpush1.msra.mxu0 0.0
        %336 = vmatprep.subr.mxu0 0.0
        %337 = vmatpush1.msra.mxu0 0.0
        %338 = vmatprep.subr.mxu0 0.0
        %339 = vmatpush1.msra.mxu0 0.0
        %340 = vmatprep.subr.mxu0 0.0
        %341 = vmatpush1.msra.mxu0 0.0
        %342 = vmatprep.subr.mxu0 0.0
        %343 = vmatpush1.msra.mxu0 0.0
        %344 = vmatprep.subr.mxu0 0.0
        %345 = vmatpush1.msra.mxu0 0.0
        %346 = vmatprep.subr.mxu0 0.0
        %347 = vmatpush1.msra.mxu0 0.0
        %348 = vmatprep.subr.mxu0 0.0
        %349 = vmatpush1.msra.mxu0 0.0
        %350 = vmatprep.subr.mxu0 0.0
        %351 = vmatpush1.msra.mxu0 %v318
        %352 = vmatprep.subr.mxu0 0.0
        %353 = vmatpush2.msra.mxu0 0.0
        %354 = vmatprep.subr.mxu0 0.0
        %355 = vmatpush2.msra.mxu0 0.0
        %356 = vmatprep.subr.mxu0 0.0
        %357 = vmatpush2.msra.mxu0 0.0
        %358 = vmatprep.subr.mxu0 0.0
        %359 = vmatpush2.msra.mxu0 0.0
        %360 = vmatprep.subr.mxu0 0.0
        %361 = vmatpush2.msra.mxu0 0.0
        %362 = vmatprep.subr.mxu0 0.0
        %363 = vmatpush2.msra.mxu0 0.0
        %364 = vmatprep.subr.mxu0 0.0
        %365 = vmatpush2.msra.mxu0 0.0
        %366 = vmatprep.subr.mxu0 0.0
        %367 = vmatpush2.msra.mxu0 0.0
        %368 = vmatprep.subr.mxu0 0.0
        %369 = vmatpush2.msra.mxu0 0.0
        %370 = vmatprep.subr.mxu0 0.0
        %371 = vmatpush2.msra.mxu0 0.0
        %372 = vmatprep.subr.mxu0 0.0
        %373 = vmatpush2.msra.mxu0 0.0
        %374 = vmatprep.subr.mxu0 0.0
        %375 = vmatpush2.msra.mxu0 0.0
        %376 = vmatprep.subr.mxu0 0.0
        %377 = vmatpush2.msra.mxu0 0.0
        %378 = vmatprep.subr.mxu0 0.0
        %379 = vmatpush2.msra.mxu0 0.0
        %380 = vmatprep.subr.mxu0 0.0
        %381 = vmatpush2.msra.mxu0 0.0
        %382 = vmatprep.subr.mxu0 0.0
        %383 = vmatpush2.msra.mxu0 0.0
        %384 = vmatprep.mubr.f32.mxu0 0.0
        %385 = vmatmul.mubr.f32.gmra.mxu0 %v305
        %v386 = vpop.f32.mrf.mxu0
        %v387 = vadd.f32 %v286, %v386
        %v388 = vpop.f32.mrf.mxu0
        %389 = vmatprep.mubr.f32.mxu0 0.0
        %390 = vmatmul.mubr.f32.gmra.mxu0 %v308
        %v391 = vpop.f32.mrf.mxu0
        %v392 = vadd.f32 %v291, %v391
        %v393 = vpop.f32.mrf.mxu0
        %394 = vmatprep.mubr.f32.mxu0 0.0
        %395 = vmatmul.mubr.f32.gmra.mxu0 %v311
        %v396 = vpop.f32.mrf.mxu0
        %v397 = vadd.f32 %v296, %v396
        %v398 = vpop.f32.mrf.mxu0
        %399 = vmatprep.mubr.f32.mxu0 0.0
        %400 = vmatmul.mubr.f32.gmra.mxu0 %v314
        %v401 = vpop.f32.mrf.mxu0
        %v402 = vadd.f32 %v301, %v401
        %v403 = vpop.f32.mrf.mxu0
        %404 = vdwg.mxu0
        %vm405 = vcmp.ge.f32.partialorder %v387, 0.0
        %vm406 = vcmp.ge.f32.partialorder %v392, 0.0
        %vm407 = vcmp.ge.f32.partialorder %v397, 0.0
        %vm408 = vcmp.ge.f32.partialorder %v402, 0.0
        %v409 = vmul.f32 %v387, 0.5
        %v410 = vmul.f32 %v392, 0.5
        %v411 = vmul.f32 %v397, 0.5
        %v412 = vmul.f32 %v402, 0.5
        %v413 = vsel %vm405, %v387, %v409
        %v414 = vsel %vm406, %v392, %v410
        %v415 = vsel %vm407, %v397, %v411
        %v416 = vsel %vm408, %v402, %v412
        %v417 = vld [vmem:[%s3] sm:$0xff]
        %v418 = vld [vmem:[%s3 + $0x8] sm:$0xff]
        %v419 = vld [vmem:[%s3 + $0x10] sm:$0xff]
        %v420 = vld [vmem:[%s3 + $0x18] sm:$0xff]
        %v421 = vld [vmem:[%s4] sm:$0xff]
        %v422 = vld [vmem:[%s4 + $0x8] sm:$0xff]
        %v423 = vld [vmem:[%s4 + $0x10] sm:$0xff]
        %v424 = vld [vmem:[%s4 + $0x18] sm:$0xff]
        %426 = vset.pattern.permute.xlu0 0
        %427 = vperm.xlu0 %426, %v421
        %v428 = vpop.permute.xlu0 %427
        %431 = vset.pattern.permute.xlu0 0
        %432 = vperm.xlu0 %431, %v422
        %v433 = vpop.permute.xlu0 %432
        %436 = vset.pattern.permute.xlu0 0
        %437 = vperm.xlu0 %436, %v423
        %v438 = vpop.permute.xlu0 %437
        %441 = vset.pattern.permute.xlu0 0
        %442 = vperm.xlu0 %441, %v424
        %v443 = vpop.permute.xlu0 %442
        %vm445 = vcmask 261120
        %v447 = vsel %vm445, %v417, 0
        %v450 = vsel %vm445, %v418, 0
        %v453 = vsel %vm445, %v419, 0
        %v456 = vsel %vm445, %v420, 0
        %458 = vmatprep.subr.mxu0 0.0
        %459 = vmatpush1.msra.mxu0 0.0
        %460 = vmatprep.subr.mxu0 0.0
        %461 = vmatpush1.msra.mxu0 0.0
        %462 = vmatprep.subr.mxu0 0.0
        %463 = vmatpush1.msra.mxu0 0.0
        %464 = vmatprep.subr.mxu0 0.0
        %465 = vmatpush1.msra.mxu0 0.0
        %466 = vmatprep.subr.mxu0 0.0
        %467 = vmatpush1.msra.mxu0 0.0
        %468 = vmatprep.subr.mxu0 0.0
        %469 = vmatpush1.msra.mxu0 0.0
        %470 = vmatprep.subr.mxu0 0.0
        %471 = vmatpush1.msra.mxu0 0.0
        %472 = vmatprep.subr.mxu0 0.0
        %473 = vmatpush1.msra.mxu0 0.0
        %474 = vmatprep.subr.mxu0 0.0
        %475 = vmatpush1.msra.mxu0 0.0
        %476 = vmatprep.subr.mxu0 0.0
        %477 = vmatpush1.msra.mxu0 0.0
        %478 = vmatprep.subr.mxu0 0.0
        %479 = vmatpush1.msra.mxu0 0.0
        %480 = vmatprep.subr.mxu0 0.0
        %481 = vmatpush1.msra.mxu0 0.0
        %482 = vmatprep.subr.mxu0 0.0
        %483 = vmatpush1.msra.mxu0 %v416
        %484 = vmatprep.subr.mxu0 0.0
        %485 = vmatpush1.msra.mxu0 %v415
        %486 = vmatprep.subr.mxu0 0.0
        %487 = vmatpush1.msra.mxu0 %v414
        %488 = vmatprep.subr.mxu0 0.0
        %489 = vmatpush1.msra.mxu0 %v413
        %490 = vmatprep.subr.mxu0 0.0
        %491 = vmatpush2.msra.mxu0 0.0
        %492 = vmatprep.subr.mxu0 0.0
        %493 = vmatpush2.msra.mxu0 0.0
        %494 = vmatprep.subr.mxu0 0.0
        %495 = vmatpush2.msra.mxu0 0.0
        %496 = vmatprep.subr.mxu0 0.0
        %497 = vmatpush2.msra.mxu0 0.0
        %498 = vmatprep.subr.mxu0 0.0
        %499 = vmatpush2.msra.mxu0 0.0
        %500 = vmatprep.subr.mxu0 0.0
        %501 = vmatpush2.msra.mxu0 0.0
        %502 = vmatprep.subr.mxu0 0.0
        %503 = vmatpush2.msra.mxu0 0.0
        %504 = vmatprep.subr.mxu0 0.0
        %505 = vmatpush2.msra.mxu0 0.0
        %506 = vmatprep.subr.mxu0 0.0
        %507 = vmatpush2.msra.mxu0 0.0
        %508 = vmatprep.subr.mxu0 0.0
        %509 = vmatpush2.msra.mxu0 0.0
        %510 = vmatprep.subr.mxu0 0.0
        %511 = vmatpush2.msra.mxu0 0.0
        %512 = vmatprep.subr.mxu0 0.0
        %513 = vmatpush2.msra.mxu0 0.0
        %514 = vmatprep.subr.mxu0 0.0
        %515 = vmatpush2.msra.mxu0 0.0
        %516 = vmatprep.subr.mxu0 0.0
        %517 = vmatpush2.msra.mxu0 0.0
        %518 = vmatprep.subr.mxu0 0.0
        %519 = vmatpush2.msra.mxu0 0.0
        %520 = vmatprep.subr.mxu0 0.0
        %521 = vmatpush2.msra.mxu0 0.0
        %522 = vmatprep.mubr.f32.mxu0 0.0
        %523 = vmatmul.mubr.f32.gmra.mxu0 %v447
        %v524 = vpop.f32.mrf.mxu0
        %v525 = vadd.f32 %v428, %v524
        %v526 = vpop.f32.mrf.mxu0
        %527 = vmatprep.mubr.f32.mxu0 0.0
        %528 = vmatmul.mubr.f32.gmra.mxu0 %v450
        %v529 = vpop.f32.mrf.mxu0
        %v530 = vadd.f32 %v433, %v529
        %v531 = vpop.f32.mrf.mxu0
        %532 = vmatprep.mubr.f32.mxu0 0.0
        %533 = vmatmul.mubr.f32.gmra.mxu0 %v453
        %v534 = vpop.f32.mrf.mxu0
        %v535 = vadd.f32 %v438, %v534
        %v536 = vpop.f32.mrf.mxu0
        %537 = vmatprep.mubr.f32.mxu0 0.0
        %538 = vmatmul.mubr.f32.gmra.mxu0 %v456
        %v539 = vpop.f32.mrf.mxu0
        %v540 = vadd.f32 %v443, %v539
        %v541 = vpop.f32.mrf.mxu0
        %542 = vdwg.mxu0
        %vm543 = vcmp.ge.f32.partialorder %v525, 0.0
        %vm544 = vcmp.ge.f32.partialorder %v530, 0.0
        %vm545 = vcmp.ge.f32.partialorder %v535, 0.0
        %vm546 = vcmp.ge.f32.partialorder %v540, 0.0
        %v547 = vmul.f32 %v525, 0.5
        %v548 = vmul.f32 %v530, 0.5
        %v549 = vmul.f32 %v535, 0.5
        %v550 = vmul.f32 %v540, 0.5
        %v551 = vsel %vm543, %v525, %v547
        %v552 = vsel %vm544, %v530, %v548
        %v553 = vsel %vm545, %v535, %v549
        %v554 = vsel %vm546, %v540, %v550
        %s555 = scalar_lea.vmem %s3, 32
        %v556 = vld [vmem:[%s555] sm:$0xff]
        %v557 = vld [vmem:[%s555 + $0x8] sm:$0xff]
        %v558 = vld [vmem:[%s555 + $0x10] sm:$0xff]
        %v559 = vld [vmem:[%s555 + $0x18] sm:$0xff]
        %s560 = scalar_lea.vmem %s4, 32
        %v561 = vld [vmem:[%s560] sm:$0xff]
        %v562 = vld [vmem:[%s560 + $0x8] sm:$0xff]
        %v563 = vld [vmem:[%s560 + $0x10] sm:$0xff]
        %v564 = vld [vmem:[%s560 + $0x18] sm:$0xff]
        %566 = vset.pattern.permute.xlu0 0
        %567 = vperm.xlu0 %566, %v561
        %v568 = vpop.permute.xlu0 %567
        %571 = vset.pattern.permute.xlu0 0
        %572 = vperm.xlu0 %571, %v562
        %v573 = vpop.permute.xlu0 %572
        %576 = vset.pattern.permute.xlu0 0
        %577 = vperm.xlu0 %576, %v563
        %v578 = vpop.permute.xlu0 %577
        %581 = vset.pattern.permute.xlu0 0
        %582 = vperm.xlu0 %581, %v564
        %v583 = vpop.permute.xlu0 %582
        %v586 = vsel %vm445, %v556, 0
        %v589 = vsel %vm445, %v557, 0
        %v592 = vsel %vm445, %v558, 0
        %v595 = vsel %vm445, %v559, 0
        %597 = vmatprep.subr.mxu0 0.0
        %598 = vmatpush1.msra.mxu0 0.0
        %599 = vmatprep.subr.mxu0 0.0
        %600 = vmatpush1.msra.mxu0 0.0
        %601 = vmatprep.subr.mxu0 0.0
        %602 = vmatpush1.msra.mxu0 0.0
        %603 = vmatprep.subr.mxu0 0.0
        %604 = vmatpush1.msra.mxu0 0.0
        %605 = vmatprep.subr.mxu0 0.0
        %606 = vmatpush1.msra.mxu0 0.0
        %607 = vmatprep.subr.mxu0 0.0
        %608 = vmatpush1.msra.mxu0 0.0
        %609 = vmatprep.subr.mxu0 0.0
        %610 = vmatpush1.msra.mxu0 0.0
        %611 = vmatprep.subr.mxu0 0.0
        %612 = vmatpush1.msra.mxu0 0.0
        %613 = vmatprep.subr.mxu0 0.0
        %614 = vmatpush1.msra.mxu0 0.0
        %615 = vmatprep.subr.mxu0 0.0
        %616 = vmatpush1.msra.mxu0 0.0
        %617 = vmatprep.subr.mxu0 0.0
        %618 = vmatpush1.msra.mxu0 0.0
        %619 = vmatprep.subr.mxu0 0.0
        %620 = vmatpush1.msra.mxu0 0.0
        %621 = vmatprep.subr.mxu0 0.0
        %622 = vmatpush1.msra.mxu0 %v554
        %623 = vmatprep.subr.mxu0 0.0
        %624 = vmatpush1.msra.mxu0 %v553
        %625 = vmatprep.subr.mxu0 0.0
        %626 = vmatpush1.msra.mxu0 %v552
        %627 = vmatprep.subr.mxu0 0.0
        %628 = vmatpush1.msra.mxu0 %v551
        %629 = vmatprep.subr.mxu0 0.0
        %630 = vmatpush2.msra.mxu0 0.0
        %631 = vmatprep.subr.mxu0 0.0
        %632 = vmatpush2.msra.mxu0 0.0
        %633 = vmatprep.subr.mxu0 0.0
        %634 = vmatpush2.msra.mxu0 0.0
        %635 = vmatprep.subr.mxu0 0.0
        %636 = vmatpush2.msra.mxu0 0.0
        %637 = vmatprep.subr.mxu0 0.0
        %638 = vmatpush2.msra.mxu0 0.0
        %639 = vmatprep.subr.mxu0 0.0
        %640 = vmatpush2.msra.mxu0 0.0
        %641 = vmatprep.subr.mxu0 0.0
        %642 = vmatpush2.msra.mxu0 0.0
        %643 = vmatprep.subr.mxu0 0.0
        %644 = vmatpush2.msra.mxu0 0.0
        %645 = vmatprep.subr.mxu0 0.0
        %646 = vmatpush2.msra.mxu0 0.0
        %647 = vmatprep.subr.mxu0 0.0
        %648 = vmatpush2.msra.mxu0 0.0
        %649 = vmatprep.subr.mxu0 0.0
        %650 = vmatpush2.msra.mxu0 0.0
        %651 = vmatprep.subr.mxu0 0.0
        %652 = vmatpush2.msra.mxu0 0.0
        %653 = vmatprep.subr.mxu0 0.0
        %654 = vmatpush2.msra.mxu0 0.0
        %655 = vmatprep.subr.mxu0 0.0
        %656 = vmatpush2.msra.mxu0 0.0
        %657 = vmatprep.subr.mxu0 0.0
        %658 = vmatpush2.msra.mxu0 0.0
        %659 = vmatprep.subr.mxu0 0.0
        %660 = vmatpush2.msra.mxu0 0.0
        %661 = vmatprep.mubr.f32.mxu0 0.0
        %662 = vmatmul.mubr.f32.gmra.mxu0 %v586
        %v663 = vpop.f32.mrf.mxu0
        %v664 = vadd.f32 %v568, %v663
        %v665 = vpop.f32.mrf.mxu0
        %666 = vmatprep.mubr.f32.mxu0 0.0
        %667 = vmatmul.mubr.f32.gmra.mxu0 %v589
        %v668 = vpop.f32.mrf.mxu0
        %v669 = vadd.f32 %v573, %v668
        %v670 = vpop.f32.mrf.mxu0
        %671 = vmatprep.mubr.f32.mxu0 0.0
        %672 = vmatmul.mubr.f32.gmra.mxu0 %v592
        %v673 = vpop.f32.mrf.mxu0
        %v674 = vadd.f32 %v578, %v673
        %v675 = vpop.f32.mrf.mxu0
        %676 = vmatprep.mubr.f32.mxu0 0.0
        %677 = vmatmul.mubr.f32.gmra.mxu0 %v595
        %v678 = vpop.f32.mrf.mxu0
        %v679 = vadd.f32 %v583, %v678
        %v680 = vpop.f32.mrf.mxu0
        %681 = vdwg.mxu0
        %vm682 = vcmp.ge.f32.partialorder %v664, 0.0
        %vm683 = vcmp.ge.f32.partialorder %v669, 0.0
        %vm684 = vcmp.ge.f32.partialorder %v674, 0.0
        %vm685 = vcmp.ge.f32.partialorder %v679, 0.0
        %v686 = vmul.f32 %v664, 0.5
        %v687 = vmul.f32 %v669, 0.5
        %v688 = vmul.f32 %v674, 0.5
        %v689 = vmul.f32 %v679, 0.5
        %v690 = vsel %vm682, %v664, %v686
        %v691 = vsel %vm683, %v669, %v687
        %v692 = vsel %vm684, %v674, %v688
        %v693 = vsel %vm685, %v679, %v689
        %s694 = scalar_lea.vmem %s3, 64
        %v695 = vld [vmem:[%s694] sm:$0xff]
        %v696 = vld [vmem:[%s694 + $0x8] sm:$0xff]
        %v697 = vld [vmem:[%s694 + $0x10] sm:$0xff]
        %v698 = vld [vmem:[%s694 + $0x18] sm:$0xff]
        %s699 = scalar_lea.vmem %s4, 64
        %v700 = vld [vmem:[%s699] sm:$0xff]
        %v701 = vld [vmem:[%s699 + $0x8] sm:$0xff]
        %v702 = vld [vmem:[%s699 + $0x10] sm:$0xff]
        %v703 = vld [vmem:[%s699 + $0x18] sm:$0xff]
        %705 = vset.pattern.permute.xlu0 0
        %706 = vperm.xlu0 %705, %v700
        %v707 = vpop.permute.xlu0 %706
        %710 = vset.pattern.permute.xlu0 0
        %711 = vperm.xlu0 %710, %v701
        %v712 = vpop.permute.xlu0 %711
        %715 = vset.pattern.permute.xlu0 0
        %716 = vperm.xlu0 %715, %v702
        %v717 = vpop.permute.xlu0 %716
        %720 = vset.pattern.permute.xlu0 0
        %721 = vperm.xlu0 %720, %v703
        %v722 = vpop.permute.xlu0 %721
        %v725 = vsel %vm445, %v695, 0
        %v728 = vsel %vm445, %v696, 0
        %v731 = vsel %vm445, %v697, 0
        %v734 = vsel %vm445, %v698, 0
        %736 = vmatprep.subr.mxu0 0.0
        %737 = vmatpush1.msra.mxu0 0.0
        %738 = vmatprep.subr.mxu0 0.0
        %739 = vmatpush1.msra.mxu0 0.0
        %740 = vmatprep.subr.mxu0 0.0
        %741 = vmatpush1.msra.mxu0 0.0
        %742 = vmatprep.subr.mxu0 0.0
        %743 = vmatpush1.msra.mxu0 0.0
        %744 = vmatprep.subr.mxu0 0.0
        %745 = vmatpush1.msra.mxu0 0.0
        %746 = vmatprep.subr.mxu0 0.0
        %747 = vmatpush1.msra.mxu0 0.0
        %748 = vmatprep.subr.mxu0 0.0
        %749 = vmatpush1.msra.mxu0 0.0
        %750 = vmatprep.subr.mxu0 0.0
        %751 = vmatpush1.msra.mxu0 0.0
        %752 = vmatprep.subr.mxu0 0.0
        %753 = vmatpush1.msra.mxu0 0.0
        %754 = vmatprep.subr.mxu0 0.0
        %755 = vmatpush1.msra.mxu0 0.0
        %756 = vmatprep.subr.mxu0 0.0
        %757 = vmatpush1.msra.mxu0 0.0
        %758 = vmatprep.subr.mxu0 0.0
        %759 = vmatpush1.msra.mxu0 0.0
        %760 = vmatprep.subr.mxu0 0.0
        %761 = vmatpush1.msra.mxu0 %v693
        %762 = vmatprep.subr.mxu0 0.0
        %763 = vmatpush1.msra.mxu0 %v692
        %764 = vmatprep.subr.mxu0 0.0
        %765 = vmatpush1.msra.mxu0 %v691
        %766 = vmatprep.subr.mxu0 0.0
        %767 = vmatpush1.msra.mxu0 %v690
        %768 = vmatprep.subr.mxu0 0.0
        %769 = vmatpush2.msra.mxu0 0.0
        %770 = vmatprep.subr.mxu0 0.0
        %771 = vmatpush2.msra.mxu0 0.0
        %772 = vmatprep.subr.mxu0 0.0
        %773 = vmatpush2.msra.mxu0 0.0
        %774 = vmatprep.subr.mxu0 0.0
        %775 = vmatpush2.msra.mxu0 0.0
        %776 = vmatprep.subr.mxu0 0.0
        %777 = vmatpush2.msra.mxu0 0.0
        %778 = vmatprep.subr.mxu0 0.0
        %779 = vmatpush2.msra.mxu0 0.0
        %780 = vmatprep.subr.mxu0 0.0
        %781 = vmatpush2.msra.mxu0 0.0
        %782 = vmatprep.subr.mxu0 0.0
        %783 = vmatpush2.msra.mxu0 0.0
        %784 = vmatprep.subr.mxu0 0.0
        %785 = vmatpush2.msra.mxu0 0.0
        %786 = vmatprep.subr.mxu0 0.0
        %787 = vmatpush2.msra.mxu0 0.0
        %788 = vmatprep.subr.mxu0 0.0
        %789 = vmatpush2.msra.mxu0 0.0
        %790 = vmatprep.subr.mxu0 0.0
        %791 = vmatpush2.msra.mxu0 0.0
        %792 = vmatprep.subr.mxu0 0.0
        %793 = vmatpush2.msra.mxu0 0.0
        %794 = vmatprep.subr.mxu0 0.0
        %795 = vmatpush2.msra.mxu0 0.0
        %796 = vmatprep.subr.mxu0 0.0
        %797 = vmatpush2.msra.mxu0 0.0
        %798 = vmatprep.subr.mxu0 0.0
        %799 = vmatpush2.msra.mxu0 0.0
        %800 = vmatprep.mubr.f32.mxu0 0.0
        %801 = vmatmul.mubr.f32.gmra.mxu0 %v725
        %v802 = vpop.f32.mrf.mxu0
        %v803 = vadd.f32 %v707, %v802
        %v804 = vpop.f32.mrf.mxu0
        %805 = vmatprep.mubr.f32.mxu0 0.0
        %806 = vmatmul.mubr.f32.gmra.mxu0 %v728
        %v807 = vpop.f32.mrf.mxu0
        %v808 = vadd.f32 %v712, %v807
        %v809 = vpop.f32.mrf.mxu0
        %810 = vmatprep.mubr.f32.mxu0 0.0
        %811 = vmatmul.mubr.f32.gmra.mxu0 %v731
        %v812 = vpop.f32.mrf.mxu0
        %v813 = vadd.f32 %v717, %v812
        %v814 = vpop.f32.mrf.mxu0
        %815 = vmatprep.mubr.f32.mxu0 0.0
        %816 = vmatmul.mubr.f32.gmra.mxu0 %v734
        %v817 = vpop.f32.mrf.mxu0
        %v818 = vadd.f32 %v722, %v817
        %v819 = vpop.f32.mrf.mxu0
        %820 = vdwg.mxu0
        %vm821 = vcmp.ge.f32.partialorder %v803, 0.0
        %vm822 = vcmp.ge.f32.partialorder %v808, 0.0
        %vm823 = vcmp.ge.f32.partialorder %v813, 0.0
        %vm824 = vcmp.ge.f32.partialorder %v818, 0.0
        %v825 = vmul.f32 %v803, 0.5
        %v826 = vmul.f32 %v808, 0.5
        %v827 = vmul.f32 %v813, 0.5
        %v828 = vmul.f32 %v818, 0.5
        %v829 = vsel %vm821, %v803, %v825
        %v830 = vsel %vm822, %v808, %v826
        %v831 = vsel %vm823, %v813, %v827
        %v832 = vsel %vm824, %v818, %v828
        %s833 = scalar_lea.vmem %s3, 96
        %v834 = vld [vmem:[%s833] sm:$0xff]
        %v835 = vld [vmem:[%s833 + $0x8] sm:$0xff]
        %v836 = vld [vmem:[%s833 + $0x10] sm:$0xff]
        %v837 = vld [vmem:[%s833 + $0x18] sm:$0xff]
        %s838 = scalar_lea.vmem %s4, 96
        %v839 = vld [vmem:[%s838] sm:$0xff]
        %v840 = vld [vmem:[%s838 + $0x8] sm:$0xff]
        %v841 = vld [vmem:[%s838 + $0x10] sm:$0xff]
        %v842 = vld [vmem:[%s838 + $0x18] sm:$0xff]
        %844 = vset.pattern.permute.xlu0 0
        %845 = vperm.xlu0 %844, %v839
        %v846 = vpop.permute.xlu0 %845
        %849 = vset.pattern.permute.xlu0 0
        %850 = vperm.xlu0 %849, %v840
        %v851 = vpop.permute.xlu0 %850
        %854 = vset.pattern.permute.xlu0 0
        %855 = vperm.xlu0 %854, %v841
        %v856 = vpop.permute.xlu0 %855
        %859 = vset.pattern.permute.xlu0 0
        %860 = vperm.xlu0 %859, %v842
        %v861 = vpop.permute.xlu0 %860
        %v864 = vsel %vm445, %v834, 0
        %v867 = vsel %vm445, %v835, 0
        %v870 = vsel %vm445, %v836, 0
        %v873 = vsel %vm445, %v837, 0
        %875 = vmatprep.subr.mxu0 0.0
        %876 = vmatpush1.msra.mxu0 0.0
        %877 = vmatprep.subr.mxu0 0.0
        %878 = vmatpush1.msra.mxu0 0.0
        %879 = vmatprep.subr.mxu0 0.0
        %880 = vmatpush1.msra.mxu0 0.0
        %881 = vmatprep.subr.mxu0 0.0
        %882 = vmatpush1.msra.mxu0 0.0
        %883 = vmatprep.subr.mxu0 0.0
        %884 = vmatpush1.msra.mxu0 0.0
        %885 = vmatprep.subr.mxu0 0.0
        %886 = vmatpush1.msra.mxu0 0.0
        %887 = vmatprep.subr.mxu0 0.0
        %888 = vmatpush1.msra.mxu0 0.0
        %889 = vmatprep.subr.mxu0 0.0
        %890 = vmatpush1.msra.mxu0 0.0
        %891 = vmatprep.subr.mxu0 0.0
        %892 = vmatpush1.msra.mxu0 0.0
        %893 = vmatprep.subr.mxu0 0.0
        %894 = vmatpush1.msra.mxu0 0.0
        %895 = vmatprep.subr.mxu0 0.0
        %896 = vmatpush1.msra.mxu0 0.0
        %897 = vmatprep.subr.mxu0 0.0
        %898 = vmatpush1.msra.mxu0 0.0
        %899 = vmatprep.subr.mxu0 0.0
        %900 = vmatpush1.msra.mxu0 %v832
        %901 = vmatprep.subr.mxu0 0.0
        %902 = vmatpush1.msra.mxu0 %v831
        %903 = vmatprep.subr.mxu0 0.0
        %904 = vmatpush1.msra.mxu0 %v830
        %905 = vmatprep.subr.mxu0 0.0
        %906 = vmatpush1.msra.mxu0 %v829
        %907 = vmatprep.subr.mxu0 0.0
        %908 = vmatpush2.msra.mxu0 0.0
        %909 = vmatprep.subr.mxu0 0.0
        %910 = vmatpush2.msra.mxu0 0.0
        %911 = vmatprep.subr.mxu0 0.0
        %912 = vmatpush2.msra.mxu0 0.0
        %913 = vmatprep.subr.mxu0 0.0
        %914 = vmatpush2.msra.mxu0 0.0
        %915 = vmatprep.subr.mxu0 0.0
        %916 = vmatpush2.msra.mxu0 0.0
        %917 = vmatprep.subr.mxu0 0.0
        %918 = vmatpush2.msra.mxu0 0.0
        %919 = vmatprep.subr.mxu0 0.0
        %920 = vmatpush2.msra.mxu0 0.0
        %921 = vmatprep.subr.mxu0 0.0
        %922 = vmatpush2.msra.mxu0 0.0
        %923 = vmatprep.subr.mxu0 0.0
        %924 = vmatpush2.msra.mxu0 0.0
        %925 = vmatprep.subr.mxu0 0.0
        %926 = vmatpush2.msra.mxu0 0.0
        %927 = vmatprep.subr.mxu0 0.0
        %928 = vmatpush2.msra.mxu0 0.0
        %929 = vmatprep.subr.mxu0 0.0
        %930 = vmatpush2.msra.mxu0 0.0
        %931 = vmatprep.subr.mxu0 0.0
        %932 = vmatpush2.msra.mxu0 0.0
        %933 = vmatprep.subr.mxu0 0.0
        %934 = vmatpush2.msra.mxu0 0.0
        %935 = vmatprep.subr.mxu0 0.0
        %936 = vmatpush2.msra.mxu0 0.0
        %937 = vmatprep.subr.mxu0 0.0
        %938 = vmatpush2.msra.mxu0 0.0
        %939 = vmatprep.mubr.f32.mxu0 0.0
        %940 = vmatmul.mubr.f32.gmra.mxu0 %v864
        %v941 = vpop.f32.mrf.mxu0
        %v942 = vadd.f32 %v846, %v941
        %v943 = vpop.f32.mrf.mxu0
        %944 = vmatprep.mubr.f32.mxu0 0.0
        %945 = vmatmul.mubr.f32.gmra.mxu0 %v867
        %v946 = vpop.f32.mrf.mxu0
        %v947 = vadd.f32 %v851, %v946
        %v948 = vpop.f32.mrf.mxu0
        %949 = vmatprep.mubr.f32.mxu0 0.0
        %950 = vmatmul.mubr.f32.gmra.mxu0 %v870
        %v951 = vpop.f32.mrf.mxu0
        %v952 = vadd.f32 %v856, %v951
        %v953 = vpop.f32.mrf.mxu0
        %954 = vmatprep.mubr.f32.mxu0 0.0
        %955 = vmatmul.mubr.f32.gmra.mxu0 %v873
        %v956 = vpop.f32.mrf.mxu0
        %v957 = vadd.f32 %v861, %v956
        %v958 = vpop.f32.mrf.mxu0
        %959 = vdwg.mxu0
        %vm960 = vcmp.ge.f32.partialorder %v942, 0.0
        %vm961 = vcmp.ge.f32.partialorder %v947, 0.0
        %vm962 = vcmp.ge.f32.partialorder %v952, 0.0
        %vm963 = vcmp.ge.f32.partialorder %v957, 0.0
        %v964 = vmul.f32 %v942, 0.5
        %v965 = vmul.f32 %v947, 0.5
        %v966 = vmul.f32 %v952, 0.5
        %v967 = vmul.f32 %v957, 0.5
        %v968 = vsel %vm960, %v942, %v964
        %v969 = vsel %vm961, %v947, %v965
        %v970 = vsel %vm962, %v952, %v966
        %v971 = vsel %vm963, %v957, %v967
        %s972 = scalar_lea.vmem %s3, 128
        %v973 = vld [vmem:[%s972] sm:$0xff]
        %v974 = vld [vmem:[%s972 + $0x8] sm:$0xff]
        %v975 = vld [vmem:[%s972 + $0x10] sm:$0xff]
        %v976 = vld [vmem:[%s972 + $0x18] sm:$0xff]
        %s977 = scalar_lea.vmem %s4, 128
        %v978 = vld [vmem:[%s977] sm:$0xff]
        %v979 = vld [vmem:[%s977 + $0x8] sm:$0xff]
        %v980 = vld [vmem:[%s977 + $0x10] sm:$0xff]
        %v981 = vld [vmem:[%s977 + $0x18] sm:$0xff]
        %983 = vset.pattern.permute.xlu0 0
        %984 = vperm.xlu0 %983, %v978
        %v985 = vpop.permute.xlu0 %984
        %988 = vset.pattern.permute.xlu0 0
        %989 = vperm.xlu0 %988, %v979
        %v990 = vpop.permute.xlu0 %989
        %993 = vset.pattern.permute.xlu0 0
        %994 = vperm.xlu0 %993, %v980
        %v995 = vpop.permute.xlu0 %994
        %998 = vset.pattern.permute.xlu0 0
        %999 = vperm.xlu0 %998, %v981
        %v1000 = vpop.permute.xlu0 %999
        %v1003 = vsel %vm445, %v973, 0
        %v1006 = vsel %vm445, %v974, 0
        %v1009 = vsel %vm445, %v975, 0
        %v1012 = vsel %vm445, %v976, 0
        %1014 = vmatprep.subr.mxu0 0.0
        %1015 = vmatpush1.msra.mxu0 0.0
        %1016 = vmatprep.subr.mxu0 0.0
        %1017 = vmatpush1.msra.mxu0 0.0
        %1018 = vmatprep.subr.mxu0 0.0
        %1019 = vmatpush1.msra.mxu0 0.0
        %1020 = vmatprep.subr.mxu0 0.0
        %1021 = vmatpush1.msra.mxu0 0.0
        %1022 = vmatprep.subr.mxu0 0.0
        %1023 = vmatpush1.msra.mxu0 0.0
        %1024 = vmatprep.subr.mxu0 0.0
        %1025 = vmatpush1.msra.mxu0 0.0
        %1026 = vmatprep.subr.mxu0 0.0
        %1027 = vmatpush1.msra.mxu0 0.0
        %1028 = vmatprep.subr.mxu0 0.0
        %1029 = vmatpush1.msra.mxu0 0.0
        %1030 = vmatprep.subr.mxu0 0.0
        %1031 = vmatpush1.msra.mxu0 0.0
        %1032 = vmatprep.subr.mxu0 0.0
        %1033 = vmatpush1.msra.mxu0 0.0
        %1034 = vmatprep.subr.mxu0 0.0
        %1035 = vmatpush1.msra.mxu0 0.0
        %1036 = vmatprep.subr.mxu0 0.0
        %1037 = vmatpush1.msra.mxu0 0.0
        %1038 = vmatprep.subr.mxu0 0.0
        %1039 = vmatpush1.msra.mxu0 %v971
        %1040 = vmatprep.subr.mxu0 0.0
        %1041 = vmatpush1.msra.mxu0 %v970
        %1042 = vmatprep.subr.mxu0 0.0
        %1043 = vmatpush1.msra.mxu0 %v969
        %1044 = vmatprep.subr.mxu0 0.0
        %1045 = vmatpush1.msra.mxu0 %v968
        %1046 = vmatprep.subr.mxu0 0.0
        %1047 = vmatpush2.msra.mxu0 0.0
        %1048 = vmatprep.subr.mxu0 0.0
        %1049 = vmatpush2.msra.mxu0 0.0
        %1050 = vmatprep.subr.mxu0 0.0
        %1051 = vmatpush2.msra.mxu0 0.0
        %1052 = vmatprep.subr.mxu0 0.0
        %1053 = vmatpush2.msra.mxu0 0.0
        %1054 = vmatprep.subr.mxu0 0.0
        %1055 = vmatpush2.msra.mxu0 0.0
        %1056 = vmatprep.subr.mxu0 0.0
        %1057 = vmatpush2.msra.mxu0 0.0
        %1058 = vmatprep.subr.mxu0 0.0
        %1059 = vmatpush2.msra.mxu0 0.0
        %1060 = vmatprep.subr.mxu0 0.0
        %1061 = vmatpush2.msra.mxu0 0.0
        %1062 = vmatprep.subr.mxu0 0.0
        %1063 = vmatpush2.msra.mxu0 0.0
        %1064 = vmatprep.subr.mxu0 0.0
        %1065 = vmatpush2.msra.mxu0 0.0
        %1066 = vmatprep.subr.mxu0 0.0
        %1067 = vmatpush2.msra.mxu0 0.0
        %1068 = vmatprep.subr.mxu0 0.0
        %1069 = vmatpush2.msra.mxu0 0.0
        %1070 = vmatprep.subr.mxu0 0.0
        %1071 = vmatpush2.msra.mxu0 0.0
        %1072 = vmatprep.subr.mxu0 0.0
        %1073 = vmatpush2.msra.mxu0 0.0
        %1074 = vmatprep.subr.mxu0 0.0
        %1075 = vmatpush2.msra.mxu0 0.0
        %1076 = vmatprep.subr.mxu0 0.0
        %1077 = vmatpush2.msra.mxu0 0.0
        %1078 = vmatprep.mubr.f32.mxu0 0.0
        %1079 = vmatmul.mubr.f32.gmra.mxu0 %v1003
        %v1080 = vpop.f32.mrf.mxu0
        %v1081 = vadd.f32 %v985, %v1080
        %v1082 = vpop.f32.mrf.mxu0
        %1083 = vmatprep.mubr.f32.mxu0 0.0
        %1084 = vmatmul.mubr.f32.gmra.mxu0 %v1006
        %v1085 = vpop.f32.mrf.mxu0
        %v1086 = vadd.f32 %v990, %v1085
        %v1087 = vpop.f32.mrf.mxu0
        %1088 = vmatprep.mubr.f32.mxu0 0.0
        %1089 = vmatmul.mubr.f32.gmra.mxu0 %v1009
        %v1090 = vpop.f32.mrf.mxu0
        %v1091 = vadd.f32 %v995, %v1090
        %v1092 = vpop.f32.mrf.mxu0
        %1093 = vmatprep.mubr.f32.mxu0 0.0
        %1094 = vmatmul.mubr.f32.gmra.mxu0 %v1012
        %v1095 = vpop.f32.mrf.mxu0
        %v1096 = vadd.f32 %v1000, %v1095
        %v1097 = vpop.f32.mrf.mxu0
        %1098 = vdwg.mxu0
        %vm1099 = vcmp.ge.f32.partialorder %v1081, 0.0
        %vm1100 = vcmp.ge.f32.partialorder %v1086, 0.0
        %vm1101 = vcmp.ge.f32.partialorder %v1091, 0.0
        %vm1102 = vcmp.ge.f32.partialorder %v1096, 0.0
        %v1103 = vmul.f32 %v1081, 0.5
        %v1104 = vmul.f32 %v1086, 0.5
        %v1105 = vmul.f32 %v1091, 0.5
        %v1106 = vmul.f32 %v1096, 0.5
        %v1107 = vsel %vm1099, %v1081, %v1103
        %v1108 = vsel %vm1100, %v1086, %v1104
        %v1109 = vsel %vm1101, %v1091, %v1105
        %v1110 = vsel %vm1102, %v1096, %v1106
        %v1111 = vld [vmem:[%s5] sm:$0xf]
        %v1112 = vld [vmem:[%s6] sm:$0xf]
        %1114 = vset.pattern.permute.xlu0 0
        %1115 = vperm.xlu0 %1114, %v1112
        %v1116 = vpop.permute.xlu0 %1115
        %v1119 = vsel %vm445, %v1111, 0
        %1121 = vmatprep.subr.mxu0 0.0
        %1122 = vmatpush1.msra.mxu0 0.0
        %1123 = vmatprep.subr.mxu0 0.0
        %1124 = vmatpush1.msra.mxu0 0.0
        %1125 = vmatprep.subr.mxu0 0.0
        %1126 = vmatpush1.msra.mxu0 0.0
        %1127 = vmatprep.subr.mxu0 0.0
        %1128 = vmatpush1.msra.mxu0 0.0
        %1129 = vmatprep.subr.mxu0 0.0
        %1130 = vmatpush1.msra.mxu0 0.0
        %1131 = vmatprep.subr.mxu0 0.0
        %1132 = vmatpush1.msra.mxu0 0.0
        %1133 = vmatprep.subr.mxu0 0.0
        %1134 = vmatpush1.msra.mxu0 0.0
        %1135 = vmatprep.subr.mxu0 0.0
        %1136 = vmatpush1.msra.mxu0 0.0
        %1137 = vmatprep.subr.mxu0 0.0
        %1138 = vmatpush1.msra.mxu0 0.0
        %1139 = vmatprep.subr.mxu0 0.0
        %1140 = vmatpush1.msra.mxu0 0.0
        %1141 = vmatprep.subr.mxu0 0.0
        %1142 = vmatpush1.msra.mxu0 0.0
        %1143 = vmatprep.subr.mxu0 0.0
        %1144 = vmatpush1.msra.mxu0 0.0
        %1145 = vmatprep.subr.mxu0 0.0
        %1146 = vmatpush1.msra.mxu0 %v1110
        %1147 = vmatprep.subr.mxu0 0.0
        %1148 = vmatpush1.msra.mxu0 %v1109
        %1149 = vmatprep.subr.mxu0 0.0
        %1150 = vmatpush1.msra.mxu0 %v1108
        %1151 = vmatprep.subr.mxu0 0.0
        %1152 = vmatpush1.msra.mxu0 %v1107
        %1153 = vmatprep.subr.mxu0 0.0
        %1154 = vmatpush2.msra.mxu0 0.0
        %1155 = vmatprep.subr.mxu0 0.0
        %1156 = vmatpush2.msra.mxu0 0.0
        %1157 = vmatprep.subr.mxu0 0.0
        %1158 = vmatpush2.msra.mxu0 0.0
        %1159 = vmatprep.subr.mxu0 0.0
        %1160 = vmatpush2.msra.mxu0 0.0
        %1161 = vmatprep.subr.mxu0 0.0
        %1162 = vmatpush2.msra.mxu0 0.0
        %1163 = vmatprep.subr.mxu0 0.0
        %1164 = vmatpush2.msra.mxu0 0.0
        %1165 = vmatprep.subr.mxu0 0.0
        %1166 = vmatpush2.msra.mxu0 0.0
        %1167 = vmatprep.subr.mxu0 0.0
        %1168 = vmatpush2.msra.mxu0 0.0
        %1169 = vmatprep.subr.mxu0 0.0
        %1170 = vmatpush2.msra.mxu0 0.0
        %1171 = vmatprep.subr.mxu0 0.0
        %1172 = vmatpush2.msra.mxu0 0.0
        %1173 = vmatprep.subr.mxu0 0.0
        %1174 = vmatpush2.msra.mxu0 0.0
        %1175 = vmatprep.subr.mxu0 0.0
        %1176 = vmatpush2.msra.mxu0 0.0
        %1177 = vmatprep.subr.mxu0 0.0
        %1178 = vmatpush2.msra.mxu0 0.0
        %1179 = vmatprep.subr.mxu0 0.0
        %1180 = vmatpush2.msra.mxu0 0.0
        %1181 = vmatprep.subr.mxu0 0.0
        %1182 = vmatpush2.msra.mxu0 0.0
        %1183 = vmatprep.subr.mxu0 0.0
        %1184 = vmatpush2.msra.mxu0 0.0
        %1185 = vmatprep.mubr.f32.mxu0 0.0
        %1186 = vmatmul.mubr.f32.gmra.mxu0 %v1119
        %v1187 = vpop.f32.mrf.mxu0
        %v1188 = vadd.f32 %v1116, %v1187
        %v1189 = vpop.f32.mrf.mxu0
        %1190 = vdwg.mxu0
        %1191 = vst [vmem:[%s269] sm:$0xf] %v1188
        %s1192 = sand.u32 %s181, 1
        %s1193 = scalar_lea.sflag [#allocation3], %s1192
        %s1194 = sand.u32 %s181, 1
        %s1195 = smul.addr %s1194, 4
        %s1196 = scalar_lea.vmem [#allocation2], %s1195
        // Predicated region
        $region49: #{vector_field_mlp.1} parent=47 // pred_check
          %p1197 = pneg %p191
        $region50: #{vector_field_mlp.1} parent=47 // pred_check_branch
          %1199 = sbr.rel (%p1197) target = $region52
        $region51: #{vector_field_mlp.1} parent=47 // pred_region
          %s1201 = ssub.s32 64, 64
          %1202 = vsyncadd %s1193, %s1201
          %s1203 = smul.addr %s21, 64
          %s1204 = scalar_lea.hbm %s7, %s1203
          %s1206 = sshll.u32 %s1196, 4
          %s1207 = int_to_ptr.vmem [resolvable:$true] %s1206
          %1209 = dma.vmem_to_hbm [thread:$0]  %s1207, 64, %s1204, %s1193
        $region52: #{vector_field_mlp.1} parent=47 // pred_fallthru
          _
      $region48: #{vector_field_mlp.1} parent=5 // pred_fallthru
        _
      %p1210 = scmp.le.s32.totalorder 2, %s16
      // Predicated region
      $region53: #{vector_field_mlp.1} parent=5 // pred_check
        %p1211 = pneg %p1210
      $region54: #{vector_field_mlp.1} parent=5 // pred_check_branch
        %1213 = sbr.rel (%p1211) target = $region56
      $region55: #{vector_field_mlp.1} parent=5 // pred_region
        %s1214 = ssub.s32 %s16, 2
        // Predicated region
        $region57: #{vector_field_mlp.1} parent=55 // pred_check
          %p1215 = pneg %p197
        $region58: #{vector_field_mlp.1} parent=55 // pred_check_branch
          %1217 = sbr.rel (%p1215) target = $region60
        $region59: #{vector_field_mlp.1} parent=55 // pred_region
          %s1218 = sand.u32 %s182, 1
          %s1219 = scalar_lea.sflag [#allocation3], %s1218
          %s1220 = sand.u32 %s182, 1
          %s1221 = smul.addr %s1220, 4
          %s1222 = scalar_lea.vmem [#allocation2], %s1221
          %1223 = dma.done %s1219, 64
        $region60: #{vector_field_mlp.1} parent=55 // pred_fallthru
          _
      $region56: #{vector_field_mlp.1} parent=5 // pred_fallthru
        _
    $region6: #{vector_field_mlp.1} parent=1 // loop_footer
      %s20 = sadd.s32 1, %s16
    $region7: #{vector_field_mlp.1} parent=1 // loop_footer_branch
      %15 = sbr.rel target = $region3
    $region8: #{vector_field_mlp.1} parent=1 // loop_exit
      _
    %1224 = vsyncpa [#allocation3], 1
    %s1225 = scalar_lea.sflag [#allocation3], 1
    %1226 = vsyncpa %s1225, 1

</llo_original>
